<compile_context>
chip_gen: v5e
topology: v5e:2x2
jax: 0.10.0
libtpu: 0.0.40
codegen_flags: <defaults>
</compile_context>

<pallas_src>
import jax
import jax.numpy as jnp
from jax.experimental import pallas as pl
from jax.experimental.pallas import tpu as pltpu


def _round_up(n, m):
    return ((n + m - 1) // m) * m


def _linear_kernel_vpu(x_ref, w_ref, b_ref, o_ref):
    # x_ref: (TM, F)   w_ref: (1, F)   b_ref: (1,) in SMEM   o_ref: (TM, 1)
    x = x_ref[...].astype(jnp.float32)
    w = w_ref[...].astype(jnp.float32)            # broadcast over sublanes (cheap)
    acc = jnp.sum(x * w, axis=-1, keepdims=True)  # VPU multiply + XLU lane-reduce
    o_ref[...] = (acc + b_ref[0]).astype(o_ref.dtype)


def _linear_kernel_mxu(x_ref, w_ref, b_ref, o_ref):
    # x_ref: (TM, F)   w_ref: (F, 1)   b_ref: (1,) in SMEM   o_ref: (TM, 1)
    x = x_ref[...].astype(jnp.float32)
    w = w_ref[...].astype(jnp.float32)
    acc = jnp.dot(x, w, preferred_element_type=jnp.float32)  # N=1 MXU matmul
    o_ref[...] = (acc + b_ref[0]).astype(o_ref.dtype)


def _vmem_limit_bytes(tm, F, x_dtype):
    """Scoped-VMEM budget: double-buffered x stream + lane-padded output + weight."""
    lane_f = _round_up(F, 128)
    itemsize = jnp.dtype(x_dtype).itemsize
    x_bytes = 2 * tm * lane_f * itemsize          # double-buffered x tiles
    out_bytes = 2 * tm * 128 * 4                  # (tm, 1) f32 output, lane-padded
    w_bytes = 2 * _round_up(F, 8) * 128 * 4       # resident weight (either layout)
    need = x_bytes + out_bytes + w_bytes + (4 << 20)   # headroom for compiler scratch
    # Never below the smallest scoped default; stay well under v7x's 64 MiB physical.
    return int(min(max(need, 16 << 20), 48 << 20))


def classifier_forward(x, weight, bias, *, block_m=2048, use_mxu=False):
    """x: (B, 514); weight: (1, 514) (PyTorch nn.Linear layout); bias: (1,).

    Returns (B, 1) float32 with nn.Linear(514, 1) semantics: y = x @ W.T + b.

    block_m: batch rows per grid step. 2048 fits every chip's scoped-VMEM
      default; use 4096 on v6e / 4096-8192 on v7x for better DMA amortization.
    use_mxu: route the dot product through the MXU instead of the VPU+XLU
      lane-reduce. Recommended on v7x and whenever x is bf16.
    """
    B, F = x.shape
    assert weight.shape == (1, F)
    assert bias.shape == (1,)

    # Batch tile: multiple of 8 (sublane granularity), capped at block_m.
    tm = min(block_m, _round_up(B, 8))
    grid = (pl.cdiv(B, tm),)   # ragged final block handled by Pallas; no jnp.pad

    if use_mxu:
        kernel = _linear_kernel_mxu
        w_arg = weight.reshape(F, 1)                       # (F, 1) column layout
        w_spec = pl.BlockSpec((F, 1), lambda i: (0, 0))
    else:
        kernel = _linear_kernel_vpu
        w_arg = weight                                     # natural (1, F) layout
        w_spec = pl.BlockSpec((1, F), lambda i: (0, 0))

    out = pl.pallas_call(
        kernel,
        out_shape=jax.ShapeDtypeStruct((B, 1), jnp.float32),
        grid=grid,
        in_specs=[
            # x: tiled over batch, full feature axis per tile (double-buffered).
            pl.BlockSpec((tm, F), lambda i: (i, 0)),
            # weight: same block every step -> stays resident in VMEM.
            w_spec,
            # bias: scalar in SMEM.
            pl.BlockSpec(memory_space=pltpu.MemorySpace.SMEM),
        ],
        out_specs=pl.BlockSpec((tm, 1), lambda i: (i, 0)),
        compiler_params=pltpu.CompilerParams(
            dimension_semantics=("parallel",),
            vmem_limit_bytes=_vmem_limit_bytes(tm, F, x.dtype),
        ),
    )(x, w_arg, bias)

    return out


if __name__ == "__main__":
    key = jax.random.PRNGKey(0)
    kx, kw, kb, kx2 = jax.random.split(key, 4)

    B, IN_F, OUT_F = 8, 514, 1

    # Deterministic parameter init (mimicking nn.Linear's uniform(-1/sqrt(in), 1/sqrt(in)))
    bound = 1.0 / (IN_F ** 0.5)
    weight = jax.random.uniform(kw, (OUT_F, IN_F), jnp.float32, -bound, bound)
    bias = jax.random.uniform(kb, (OUT_F,), jnp.float32, -bound, bound)

    x = jax.random.normal(kx, (B, IN_F), jnp.float32)

    # Exact-f32 elementwise reference of nn.Linear semantics (avoids TPU matmul
    # default-precision noise in the reference itself).
    ref = jnp.sum(x * weight[0][None, :], axis=-1, keepdims=True) + bias

    # Default (VPU + XLU lane-reduce) path — exact f32.
    out = jax.block_until_ready(classifier_forward(x, weight, bias))
    assert out.shape == (B, OUT_F)
    assert jnp.allclose(out, ref, atol=1e-4, rtol=1e-4)

    # MXU-reduce path (recommended on v7x / bf16 inputs); looser tolerance since
    # MXU f32 matmul precision may differ slightly from exact f32.
    out_mxu = jax.block_until_ready(classifier_forward(x, weight, bias, use_mxu=True))
    assert out_mxu.shape == (B, OUT_F)
    assert jnp.allclose(out_mxu, ref, atol=1e-2, rtol=1e-2)

    # Ragged-batch / multi-step grid check (exercises the no-pad final block):
    # B2=300 with block_m=128 -> grid of 3 with a partial last block.
    B2 = 300
    x2 = jax.random.normal(kx2, (B2, IN_F), jnp.float32)
    ref2 = jnp.sum(x2 * weight[0][None, :], axis=-1, keepdims=True) + bias
    out2 = jax.block_until_ready(classifier_forward(x2, weight, bias, block_m=128))
    assert out2.shape == (B2, OUT_F)
    assert jnp.allclose(out2, ref2, atol=1e-4, rtol=1e-4)

    print("KERNEL_OK")
</pallas_src>

<mosaic_0001>
module attributes {stable_mosaic.version = 11 : i64} {
  func.func @_linear_kernel_vpu(%arg0: i32, %arg1: memref<8x514xf32, #tpu.memory_space<vmem>>, %arg2: memref<1x514xf32, #tpu.memory_space<vmem>>, %arg3: memref<1xf32, #tpu.memory_space<smem>>, %arg4: memref<8x1xf32, #tpu.memory_space<vmem>>) attributes {dimension_semantics = [#tpu.dimension_semantics<parallel>], iteration_bounds = array<i64: 1>, scalar_prefetch = 0 : i64, scratch_operands = 0 : i64, tpu.core_type = #tpu.core_type<tc>, window_params = [{transform_indices = @transform_0, window_bounds = array<i64: 8, 514>}, {pipeline_mode = #tpu.pipeline_mode<synchronous>, transform_indices = @transform_1, window_bounds = array<i64: 1, 514>}, {transform_indices = @transform_2, window_bounds = array<i64: 1>}, {transform_indices = @transform_3, window_bounds = array<i64: 8, 1>}]} {
    %c0 = arith.constant 0 : index
    %c0_0 = arith.constant 0 : index
    %0 = vector.load %arg1[%c0, %c0_0] : memref<8x514xf32, #tpu.memory_space<vmem>>, vector<8x514xf32>
    %c0_1 = arith.constant 0 : index
    %c0_2 = arith.constant 0 : index
    %1 = vector.load %arg2[%c0_1, %c0_2] : memref<1x514xf32, #tpu.memory_space<vmem>>, vector<1x514xf32>
    %2 = vector.broadcast %1 : vector<1x514xf32> to vector<8x514xf32>
    %3 = arith.mulf %0, %2 : vector<8x514xf32>
    %cst = arith.constant dense<0.000000e+00> : vector<8xf32>
    %4 = vector.multi_reduction <add>, %3, %cst [1] : vector<8x514xf32> to vector<8xf32>
    %5 = vector.shape_cast %4 : vector<8xf32> to vector<8x1xf32>
    %c0_3 = arith.constant 0 : index
    %6 = memref.load %arg3[%c0_3] : memref<1xf32, #tpu.memory_space<smem>>
    %7 = vector.broadcast %6 : f32 to vector<8x1xf32>
    %8 = arith.addf %5, %7 : vector<8x1xf32>
    %c0_4 = arith.constant 0 : index
    %c0_5 = arith.constant 0 : index
    %9 = vector.load %arg4[%c0_4, %c0_5] : memref<8x1xf32, #tpu.memory_space<vmem>>, vector<8x1xf32>
    tpu.vector_store %arg4[%c0_4, %c0_5], %8 {strides = array<i32>} : memref<8x1xf32, #tpu.memory_space<vmem>>, vector<8x1xf32>,
    return
  }
  func.func @transform_0(%arg0: i32) -> (i32, i32) {
    %c0_i32 = arith.constant 0 : i32
    %c0_i32_0 = arith.constant 0 : i32
    return %arg0, %c0_i32 : i32, i32
  }
  func.func @transform_1(%arg0: i32) -> (i32, i32) {
    %c0_i32 = arith.constant 0 : i32
    %c0_i32_0 = arith.constant 0 : i32
    %c0_i32_1 = arith.constant 0 : i32
    return %c0_i32, %c0_i32_0 : i32, i32
  }
  func.func @transform_2(%arg0: i32) -> i32 {
    %c0_i32 = arith.constant 0 : i32
    %c0_i32_0 = arith.constant 0 : i32
    return %c0_i32 : i32
  }
  func.func @transform_3(%arg0: i32) -> (i32, i32) {
    %c0_i32 = arith.constant 0 : i32
    %c0_i32_0 = arith.constant 0 : i32
    return %arg0, %c0_i32 : i32, i32
  }
}

</mosaic_0001>

<llo_original>
// kernel: tpu_custom_call.1
$region0: #{tpu_custom_call.1}
  #allocation0 [shape = 'u32[]', space=smem, size = 0x4, offset = 0x4, fixed_abs, tag = 'smem constant byte address 0x4 - core index']
  #allocation1 [shape = 'u32[72,128]{1,0:T(1,128)}', space=vmem, size = 0x9000, scoped, tag = 'internal scratch']
  #allocation2 [shape = 'f32[1]{0:T(128)S(6)}', space=smem, size = 0x200, scoped, tag = 'scoped memory for tpu_custom_call.1']
  %s0 = inlined_call_operand.hbm [shape: f32[8,514], index: 0, kind: input, shape index: {}]
  %s1 = inlined_call_operand.hbm [shape: f32[1,514], index: 1, kind: input, shape index: {}]
  %s2 = inlined_call_operand.<no memory space> [shape: f32[1], index: 2, kind: input, shape index: {}]
  %s3 = inlined_call_operand.vmem [shape: f32[8,1], index: 3, kind: output, shape index: {}]
  %s4 = sld [smem:[#allocation0]]
  $region30: #{tpu_custom_call.1} parent=0
    _
  %s6 = ssub.s32 1, %s4
  %s7 = scalar_select 0, %s6, %s4
  %8 = sst [smem:[#allocation2]] %s2
  $region1: #{tpu_custom_call.1} parent=0
    #allocation3 [shape = 'u8[20480]{0}', space=vmem, size = 0x5000, scoped, tag = 'input window, operand 0, single buffered']
    #allocation4 [shape = 's32[1]{0}', space=sflag, size = 0x4, scoped, tag = 'scoped memory for tpu_custom_call.1']
    #allocation5 [shape = 'u8[2560]{0}', space=vmem, size = 0xc00, scoped, tag = 'input window, operand 1, single buffered']
    #allocation6 [shape = 's32[1]{0}', space=sflag, size = 0x4, scoped, tag = 'scoped memory for tpu_custom_call.1']
    %9 = vsyncpa [#allocation4], 0
    %10 = vsyncpa [#allocation6], 0
    // Predicated region
    $region2: #{tpu_custom_call.1} parent=1 // pred_check
      _
    $region3: #{tpu_custom_call.1} parent=1 // pred_check_branch
      %12 = sbr.rel (0) target = $region5
    $region4: #{tpu_custom_call.1} parent=1 // pred_region
      %14 = vsyncadd [#allocation4], 0
      %s16 = sshll.u32 %s0, 4
      %s17 = int_to_ptr.hbm [resolvable:$true] %s16
      %s18 = sshll.u32 [#allocation3], 4
      %s19 = int_to_ptr.vmem [resolvable:$true] %s18
      %21 = dma.hbm_to_vmem [thread:$0]  %s17, 640, %s19, [#allocation4]
    $region5: #{tpu_custom_call.1} parent=1 // pred_fallthru
      _
    // Predicated region
    $region6: #{tpu_custom_call.1} parent=1 // pred_check
      _
    $region7: #{tpu_custom_call.1} parent=1 // pred_check_branch
      %23 = sbr.rel (0) target = $region9
    $region8: #{tpu_custom_call.1} parent=1 // pred_region
      %25 = vsyncadd [#allocation6], 0
      %s27 = sshll.u32 %s1, 4
      %s28 = int_to_ptr.hbm [resolvable:$true] %s27
      %s29 = sshll.u32 [#allocation5], 4
      %s30 = int_to_ptr.vmem [resolvable:$true] %s29
      %32 = dma.hbm_to_vmem [thread:$0]  %s28, 80, %s30, [#allocation6]
    $region9: #{tpu_custom_call.1} parent=1 // pred_fallthru
      _
    // Predicated region
    $region10: #{tpu_custom_call.1} parent=1 // pred_check
      _
    $region11: #{tpu_custom_call.1} parent=1 // pred_check_branch
      %34 = sbr.rel (0) target = $region13
    $region12: #{tpu_custom_call.1} parent=1 // pred_region
      _
    $region13: #{tpu_custom_call.1} parent=1 // pred_fallthru
      _
    // Predicated region
    $region14: #{tpu_custom_call.1} parent=1 // pred_check
      _
    $region15: #{tpu_custom_call.1} parent=1 // pred_check_branch
      %36 = sbr.rel (0) target = $region17
    $region16: #{tpu_custom_call.1} parent=1 // pred_region
      %38 = dma.done [#allocation4], 640
    $region17: #{tpu_custom_call.1} parent=1 // pred_fallthru
      _
    // Predicated region
    $region18: #{tpu_custom_call.1} parent=1 // pred_check
      _
    $region19: #{tpu_custom_call.1} parent=1 // pred_check_branch
      %40 = sbr.rel (0) target = $region21
    $region20: #{tpu_custom_call.1} parent=1 // pred_region
      %42 = dma.done [#allocation6], 80
    $region21: #{tpu_custom_call.1} parent=1 // pred_fallthru
      _
    %v43 = vld [vmem:[#allocation3] sm:$0xff]
    %v44 = vld [vmem:[#allocation3 + $0x8] sm:$0xff]
    %v45 = vld [vmem:[#allocation3 + $0x10] sm:$0xff]
    %v46 = vld [vmem:[#allocation3 + $0x18] sm:$0xff]
    %v47 = vld [vmem:[#allocation3 + $0x20] sm:$0xff]
    %v48 = vld [vmem:[#allocation5] sm:$0x1f]
    %v50 = vperm.slane %v48, 0
    %v51 = vperm.slane %v48, 1
    %v52 = vperm.slane %v48, 2
    %v53 = vperm.slane %v48, 3
    %v54 = vperm.slane %v48, 4
    %v60 = vmul.f32 %v43, %v50
    %v61 = vmul.f32 %v44, %v51
    %v62 = vmul.f32 %v45, %v52
    %v63 = vmul.f32 %v46, %v53
    %v64 = vmul.f32 %v47, %v54
    %v65 = vadd.f32 %v60, %v61
    %v66 = vadd.f32 %v65, %v62
    %v67 = vadd.f32 %v66, %v63
    %vm68 = vcmask 15360
    %v69 = vsel %vm68, %v64, 0.0
    %v70 = vadd.f32 %v67, %v69
    %71 = vadd.xlane.f32.xlu0 %v70
    %v72 = vpop.xlane.xlu0 %71
    %s73 = sld [smem:[#allocation2]]
    %v74 = vstv %s73
    %v75 = vadd.f32 %v72, %v74
    %vm76 = vcmask 7168
    %77 = vst.msk [vmem:[%s3] sm:$0xff] %vm76, %v75
    // Predicated region
    $region22: #{tpu_custom_call.1} parent=1 // pred_check
      _
    $region23: #{tpu_custom_call.1} parent=1 // pred_check_branch
      %79 = sbr.rel (0) target = $region25
    $region24: #{tpu_custom_call.1} parent=1 // pred_region
      _
    $region25: #{tpu_custom_call.1} parent=1 // pred_fallthru
      _
    // Predicated region
    $region26: #{tpu_custom_call.1} parent=1 // pred_check
      _
    $region27: #{tpu_custom_call.1} parent=1 // pred_check_branch
      %81 = sbr.rel (0) target = $region29
    $region28: #{tpu_custom_call.1} parent=1 // pred_region
      _
    $region29: #{tpu_custom_call.1} parent=1 // pred_fallthru
      _
    %82 = vsyncpa [#allocation4], 1
    %83 = vsyncpa [#allocation6], 1

</llo_original>
